<compile_context>
chip_gen: v7x
topology: tpu7x:2x2x1
jax: 0.10.0
libtpu: 0.0.40
codegen_flags: <defaults>
</compile_context>

<pallas_src>
import functools
import math

import jax
import jax.numpy as jnp
from jax.experimental import pallas as pl
from jax.experimental.pallas import tpu as pltpu


_HALF_LOG_2PI = 0.5 * math.log(2.0 * math.pi)


def _round_up(x: int, m: int) -> int:
    return (x + m - 1) // m * m


def actor_kernel(
    x_ref,                      # (tb, s2_pad) matmul_dtype: lanes [0,A)=eps, [A,A+S)=state
    w1_ref, w2_ref, w3_ref, w4_ref,   # padded weights, matmul_dtype
    pvec_ref,                   # (8, p_w) f32: rows 0..3 = b1..b4, row 4 = log_std
    out_ref,                    # (tb, a_pad) f32: lanes [0,A)=action, lane A = log_prob
    *, min_log_std: float, max_log_std: float, action_dim: int, matmul_dtype,
):
    f32 = jnp.float32
    h_pad = w1_ref.shape[1]     # padded hidden width (multiple of 128)
    a_pad = w4_ref.shape[1]     # padded action width (multiple of 128, > action_dim)

    b1 = pvec_ref[0:1, 0:h_pad]
    b2 = pvec_ref[1:2, 0:h_pad]
    b3 = pvec_ref[2:3, 0:h_pad]
    b4 = pvec_ref[3:4, 0:a_pad]
    log_std_raw = pvec_ref[4:5, 0:a_pad]

    # --- MLP: (Linear -> ReLU) x3 -> Linear.  MXU in matmul_dtype, f32 accumulate.
    # x already lives in matmul_dtype; eps lanes hit zero rows of w1 (no effect).
    x = x_ref[...]
    h = jnp.maximum(jnp.dot(x, w1_ref[...], preferred_element_type=f32) + b1, 0.0)
    h = jnp.maximum(
        jnp.dot(h.astype(matmul_dtype), w2_ref[...], preferred_element_type=f32) + b2, 0.0)
    h = jnp.maximum(
        jnp.dot(h.astype(matmul_dtype), w3_ref[...], preferred_element_type=f32) + b3, 0.0)
    mean = jnp.dot(h.astype(matmul_dtype), w4_ref[...], preferred_element_type=f32) + b4

    # --- Normal(mean, exp(clamped log_std)), reparameterized sample (f32 tail).
    log_std = jnp.clip(log_std_raw, min_log_std, max_log_std)       # [1, a_pad]
    std = jnp.exp(log_std)

    lane = jax.lax.broadcasted_iota(jnp.int32, (1, a_pad), 1)
    # eps sits in lanes [0, A) of the fused input slab; mask the state/pad lanes.
    eps = jnp.where(lane < action_dim, x_ref[:, 0:a_pad].astype(f32), 0.0)   # [tb, a_pad]

    action = mean + std * eps

    # --- log_prob = -0.5*sum(eps^2) - sum(log_std[:A]) - A*0.5*log(2*pi)
    log_std_sum = jnp.sum(jnp.where(lane < action_dim, log_std, 0.0),
                          axis=-1, keepdims=True)                    # [1, 1]
    lp_const = -log_std_sum - float(action_dim) * _HALF_LOG_2PI
    lp = -0.5 * jnp.sum(eps * eps, axis=-1, keepdims=True) + lp_const  # [tb, 1]

    # Pack log_prob into spare lane `action_dim` of the single lane-dense output.
    out = jnp.where(lane == action_dim, lp, action)
    out_ref[...] = out.astype(out_ref.dtype)


def actor_forward(state, eps, params, *, min_log_std=-5.0, max_log_std=2.0,
                  matmul_dtype=jnp.bfloat16, batch_tile=None):
    """state: [B, S] f32, eps: [B, A] f32 standard normal.

    Returns (action [B, A] f32, log_prob [B, 1] f32).
    """
    state = jnp.asarray(state, jnp.float32)
    eps = jnp.asarray(eps, jnp.float32)
    B, S = state.shape
    A = eps.shape[-1]
    H = params["w1"].shape[1]

    # Lane-dense padded widths.
    s2_pad = _round_up(A + S, 128)      # fused [eps | state] slab width
    h_pad = _round_up(H, 128)
    a_pad = _round_up(A + 1, 128)       # +1 guarantees a spare lane for log_prob
    p_w = max(h_pad, a_pad)

    # Batch tiling: TB rows per grid step (multiple of 8, <= 2048).
    # Prefer >= 2 grid steps so v7x's two TensorCores both get work.
    if batch_tile is not None:
        tb = max(8, _round_up(int(batch_tile), 8))
    else:
        b8 = _round_up(B, 8)
        tb = min(2048, max(8, _round_up(pl.cdiv(b8, 2), 8)))
    b_pad = _round_up(B, tb)
    grid = (b_pad // tb,)

    # Fused input slab: lanes [0,A) = eps, [A,A+S) = state, rest zero; matmul_dtype.
    fused = jnp.concatenate([eps, state], axis=-1)                      # (B, A+S)
    slab = jnp.pad(fused, ((0, b_pad - B), (0, s2_pad - (A + S)))).astype(matmul_dtype)

    def pad_w(w, rows, cols, row_off=0):
        out = jnp.zeros((rows, cols), jnp.float32)
        out = out.at[row_off:row_off + w.shape[0], :w.shape[1]].set(w.astype(jnp.float32))
        return out.astype(matmul_dtype)

    w1 = pad_w(params["w1"], s2_pad, h_pad, row_off=A)   # zero rows over the eps lanes
    w2 = pad_w(params["w2"], h_pad, h_pad)
    w3 = pad_w(params["w3"], h_pad, h_pad)
    w4 = pad_w(params["w4"], h_pad, a_pad)

    # Pack biases + log_std into one (8, p_w) buffer -> a single small DMA.
    pvec = jnp.zeros((8, p_w), jnp.float32)
    pvec = pvec.at[0, :H].set(params["b1"].astype(jnp.float32))
    pvec = pvec.at[1, :H].set(params["b2"].astype(jnp.float32))
    pvec = pvec.at[2, :H].set(params["b3"].astype(jnp.float32))
    pvec = pvec.at[3, :A].set(params["b4"].astype(jnp.float32))
    pvec = pvec.at[4, :A].set(params["log_std"].astype(jnp.float32))

    kernel = functools.partial(
        actor_kernel,
        min_log_std=float(min_log_std), max_log_std=float(max_log_std),
        action_dim=A, matmul_dtype=matmul_dtype,
    )

    out = pl.pallas_call(
        kernel,
        grid=grid,
        in_specs=[
            pl.BlockSpec((tb, s2_pad), lambda i: (i, 0)),     # fused eps|state tile
            pl.BlockSpec((s2_pad, h_pad), lambda i: (0, 0)),  # weights: VMEM-resident
            pl.BlockSpec((h_pad, h_pad), lambda i: (0, 0)),
            pl.BlockSpec((h_pad, h_pad), lambda i: (0, 0)),
            pl.BlockSpec((h_pad, a_pad), lambda i: (0, 0)),
            pl.BlockSpec((8, p_w), lambda i: (0, 0)),         # packed biases/log_std
        ],
        out_specs=pl.BlockSpec((tb, a_pad), lambda i: (i, 0)),
        out_shape=jax.ShapeDtypeStruct((b_pad, a_pad), jnp.float32),
        compiler_params=pltpu.CompilerParams(
            dimension_semantics=("parallel",),
            vmem_limit_bytes=32 * 1024 * 1024,   # fine for v7x's 64 MiB/TC budget
        ),
    )(slab, w1, w2, w3, w4, pvec)

    action = out[:B, :A]
    log_prob = out[:B, A:A + 1]
    return action, log_prob


def init_actor_params(key, state_dim, action_dim, hidden_dim,
                      init_std=1.0, bias=None):
    """Deterministic synthetic init. Weights returned as [in, out] (pre-transposed)."""
    ks = jax.random.split(key, 8)

    def linear(kw, kb, fan_in, fan_out):
        # PyTorch default Linear init: U(-1/sqrt(fan_in), 1/sqrt(fan_in))
        bound = 1.0 / jnp.sqrt(fan_in)
        w = jax.random.uniform(kw, (fan_in, fan_out), jnp.float32, -bound, bound)
        b = jax.random.uniform(kb, (fan_out,), jnp.float32, -bound, bound)
        return w, b

    w1, b1 = linear(ks[0], ks[1], state_dim, hidden_dim)
    w2, b2 = linear(ks[2], ks[3], hidden_dim, hidden_dim)
    w3, b3 = linear(ks[4], ks[5], hidden_dim, hidden_dim)
    w4, b4 = linear(ks[6], ks[7], hidden_dim, action_dim)
    if bias is not None:
        b4 = b4 + jnp.asarray(bias, jnp.float32)
    log_std = jnp.full((action_dim,), jnp.log(init_std), dtype=jnp.float32)
    return {
        "w1": w1, "b1": b1, "w2": w2, "b2": b2,
        "w3": w3, "b3": b3, "w4": w4, "b4": b4,
        "log_std": log_std,
    }


def actor_forward_ref(state, eps, params, *, min_log_std=-5.0, max_log_std=2.0,
                      matmul_dtype=jnp.float32):
    """Plain-JAX reference (optionally mirroring the kernel's matmul dtype)."""
    def mm(x, w):
        return jnp.dot(x.astype(matmul_dtype), w.astype(matmul_dtype),
                       preferred_element_type=jnp.float32)
    h = jnp.maximum(mm(state, params["w1"]) + params["b1"], 0.0)
    h = jnp.maximum(mm(h, params["w2"]) + params["b2"], 0.0)
    h = jnp.maximum(mm(h, params["w3"]) + params["b3"], 0.0)
    mean = mm(h, params["w4"]) + params["b4"]
    log_std = jnp.clip(params["log_std"], min_log_std, max_log_std)
    std = jnp.exp(log_std)
    action = mean + std * eps
    lp = -0.5 * eps ** 2 - log_std - 0.5 * jnp.log(2.0 * jnp.pi)
    return action, jnp.sum(lp, axis=-1, keepdims=True)


if __name__ == "__main__":
    # Small shapes consistent with the module's forward.
    B, STATE_DIM, ACTION_DIM, HIDDEN_DIM = 8, 16, 4, 32

    key = jax.random.PRNGKey(0)
    k_params, k_state, k_eps = jax.random.split(key, 3)

    params = init_actor_params(k_params, STATE_DIM, ACTION_DIM, HIDDEN_DIM,
                               init_std=1.0)
    state = jax.random.normal(k_state, (B, STATE_DIM), jnp.float32)
    eps = jax.random.normal(k_eps, (B, ACTION_DIM), jnp.float32)  # rsample noise

    # Production path: bf16 fused input slab + bf16 MXU matmuls, f32 accumulate/tail.
    action, log_prob = actor_forward(state, eps, params)
    jax.block_until_ready((action, log_prob))
    assert action.shape == (B, ACTION_DIM) and log_prob.shape == (B, 1)

    # Tight check vs a reference at matched precision (bf16 matmul inputs,
    # bf16-rounded eps, f32 accumulation / tail).
    eps_bf = eps.astype(jnp.bfloat16).astype(jnp.float32)
    a_ref_bf, lp_ref_bf = actor_forward_ref(state, eps_bf, params,
                                            matmul_dtype=jnp.bfloat16)
    assert jnp.allclose(action, a_ref_bf, atol=2e-3, rtol=2e-3)
    assert jnp.allclose(log_prob, lp_ref_bf, atol=1e-4, rtol=1e-4)

    # Semantic sanity vs the full-f32 reference (bf16 rounding only).
    a_ref32, lp_ref32 = actor_forward_ref(state, eps, params,
                                          matmul_dtype=jnp.float32)
    assert jnp.allclose(action, a_ref32, atol=5e-2, rtol=5e-2)
    assert jnp.allclose(log_prob, lp_ref32, atol=5e-2, rtol=5e-2)

    # Exact-precision kernel path (f32 slab + f32 matmuls): tight vs f32 reference.
    action32, log_prob32 = actor_forward(state, eps, params,
                                         matmul_dtype=jnp.float32)
    jax.block_until_ready((action32, log_prob32))
    assert jnp.allclose(action32, a_ref32, atol=1e-4, rtol=1e-4)
    assert jnp.allclose(log_prob32, lp_ref32, atol=1e-5, rtol=1e-5)

    # Exercise a multi-step grid (>= 2 batch tiles, v7x megacore path).
    B2 = 24
    state2 = jax.random.normal(jax.random.PRNGKey(1), (B2, STATE_DIM), jnp.float32)
    eps2 = jax.random.normal(jax.random.PRNGKey(2), (B2, ACTION_DIM), jnp.float32)
    a2, lp2 = actor_forward(state2, eps2, params, matmul_dtype=jnp.float32)
    a2r, lp2r = actor_forward_ref(state2, eps2, params, matmul_dtype=jnp.float32)
    jax.block_until_ready((a2, lp2))
    assert jnp.allclose(a2, a2r, atol=1e-4, rtol=1e-4)
    assert jnp.allclose(lp2, lp2r, atol=1e-5, rtol=1e-5)

    print("KERNEL_OK")
</pallas_src>

<mosaic_0001>
module attributes {stable_mosaic.version = 11 : i64} {
  func.func @actor_kernel(%arg0: i32, %arg1: memref<8x128xbf16, #tpu.memory_space<vmem>>, %arg2: memref<128x128xbf16, #tpu.memory_space<vmem>>, %arg3: memref<128x128xbf16, #tpu.memory_space<vmem>>, %arg4: memref<128x128xbf16, #tpu.memory_space<vmem>>, %arg5: memref<128x128xbf16, #tpu.memory_space<vmem>>, %arg6: memref<8x128xf32, #tpu.memory_space<vmem>>, %arg7: memref<8x128xf32, #tpu.memory_space<vmem>>) attributes {dimension_semantics = [#tpu.dimension_semantics<parallel>], iteration_bounds = array<i64: 1>, scalar_prefetch = 0 : i64, scratch_operands = 0 : i64, tpu.core_type = #tpu.core_type<tc>, window_params = [{transform_indices = @transform_0, window_bounds = array<i64: 8, 128>}, {pipeline_mode = #tpu.pipeline_mode<synchronous>, transform_indices = @transform_1, window_bounds = array<i64: 128, 128>}, {pipeline_mode = #tpu.pipeline_mode<synchronous>, transform_indices = @transform_2, window_bounds = array<i64: 128, 128>}, {pipeline_mode = #tpu.pipeline_mode<synchronous>, transform_indices = @transform_3, window_bounds = array<i64: 128, 128>}, {pipeline_mode = #tpu.pipeline_mode<synchronous>, transform_indices = @transform_4, window_bounds = array<i64: 128, 128>}, {pipeline_mode = #tpu.pipeline_mode<synchronous>, transform_indices = @transform_5, window_bounds = array<i64: 8, 128>}, {transform_indices = @transform_6, window_bounds = array<i64: 8, 128>}]} {
    %c0 = arith.constant 0 : index
    %c0_0 = arith.constant 0 : index
    %0 = vector.load %arg6[%c0, %c0_0] : memref<8x128xf32, #tpu.memory_space<vmem>>, vector<1x128xf32>
    %c1 = arith.constant 1 : index
    %c0_1 = arith.constant 0 : index
    %1 = vector.load %arg6[%c1, %c0_1] : memref<8x128xf32, #tpu.memory_space<vmem>>, vector<1x128xf32>
    %c2 = arith.constant 2 : index
    %c0_2 = arith.constant 0 : index
    %2 = vector.load %arg6[%c2, %c0_2] : memref<8x128xf32, #tpu.memory_space<vmem>>, vector<1x128xf32>
    %c3 = arith.constant 3 : index
    %c0_3 = arith.constant 0 : index
    %3 = vector.load %arg6[%c3, %c0_3] : memref<8x128xf32, #tpu.memory_space<vmem>>, vector<1x128xf32>
    %c4 = arith.constant 4 : index
    %c0_4 = arith.constant 0 : index
    %4 = vector.load %arg6[%c4, %c0_4] : memref<8x128xf32, #tpu.memory_space<vmem>>, vector<1x128xf32>
    %c0_5 = arith.constant 0 : index
    %c0_6 = arith.constant 0 : index
    %5 = vector.load %arg1[%c0_5, %c0_6] : memref<8x128xbf16, #tpu.memory_space<vmem>>, vector<8x128xbf16>
    %c0_7 = arith.constant 0 : index
    %c0_8 = arith.constant 0 : index
    %6 = vector.load %arg2[%c0_7, %c0_8] : memref<128x128xbf16, #tpu.memory_space<vmem>>, vector<128x128xbf16>
    %cst = arith.constant dense<0.000000e+00> : vector<8x128xf32>
    %7 = tpu.matmul %5, %6, %cst {dimension_numbers = #tpu.dot_dimension_numbers<[1], [0], [0], [1], [0, 0, 1, 1], [], []>} : vector<8x128xbf16>, vector<128x128xbf16>, vector<8x128xf32> -> vector<8x128xf32>
    %8 = vector.broadcast %0 : vector<1x128xf32> to vector<8x128xf32>
    %9 = arith.addf %7, %8 : vector<8x128xf32>
    %cst_9 = arith.constant 0.000000e+00 : f32
    %10 = vector.broadcast %cst_9 : f32 to vector<8x128xf32>
    %11 = arith.maximumf %9, %10 : vector<8x128xf32>
    %12 = arith.truncf %11 : vector<8x128xf32> to vector<8x128xbf16>
    %c0_10 = arith.constant 0 : index
    %c0_11 = arith.constant 0 : index
    %13 = vector.load %arg3[%c0_10, %c0_11] : memref<128x128xbf16, #tpu.memory_space<vmem>>, vector<128x128xbf16>
    %cst_12 = arith.constant dense<0.000000e+00> : vector<8x128xf32>
    %14 = tpu.matmul %12, %13, %cst_12 {dimension_numbers = #tpu.dot_dimension_numbers<[1], [0], [0], [1], [0, 0, 1, 1], [], []>} : vector<8x128xbf16>, vector<128x128xbf16>, vector<8x128xf32> -> vector<8x128xf32>
    %15 = vector.broadcast %1 : vector<1x128xf32> to vector<8x128xf32>
    %16 = arith.addf %14, %15 : vector<8x128xf32>
    %cst_13 = arith.constant 0.000000e+00 : f32
    %17 = vector.broadcast %cst_13 : f32 to vector<8x128xf32>
    %18 = arith.maximumf %16, %17 : vector<8x128xf32>
    %19 = arith.truncf %18 : vector<8x128xf32> to vector<8x128xbf16>
    %c0_14 = arith.constant 0 : index
    %c0_15 = arith.constant 0 : index
    %20 = vector.load %arg4[%c0_14, %c0_15] : memref<128x128xbf16, #tpu.memory_space<vmem>>, vector<128x128xbf16>
    %cst_16 = arith.constant dense<0.000000e+00> : vector<8x128xf32>
    %21 = tpu.matmul %19, %20, %cst_16 {dimension_numbers = #tpu.dot_dimension_numbers<[1], [0], [0], [1], [0, 0, 1, 1], [], []>} : vector<8x128xbf16>, vector<128x128xbf16>, vector<8x128xf32> -> vector<8x128xf32>
    %22 = vector.broadcast %2 : vector<1x128xf32> to vector<8x128xf32>
    %23 = arith.addf %21, %22 : vector<8x128xf32>
    %cst_17 = arith.constant 0.000000e+00 : f32
    %24 = vector.broadcast %cst_17 : f32 to vector<8x128xf32>
    %25 = arith.maximumf %23, %24 : vector<8x128xf32>
    %26 = arith.truncf %25 : vector<8x128xf32> to vector<8x128xbf16>
    %c0_18 = arith.constant 0 : index
    %c0_19 = arith.constant 0 : index
    %27 = vector.load %arg5[%c0_18, %c0_19] : memref<128x128xbf16, #tpu.memory_space<vmem>>, vector<128x128xbf16>
    %cst_20 = arith.constant dense<0.000000e+00> : vector<8x128xf32>
    %28 = tpu.matmul %26, %27, %cst_20 {dimension_numbers = #tpu.dot_dimension_numbers<[1], [0], [0], [1], [0, 0, 1, 1], [], []>} : vector<8x128xbf16>, vector<128x128xbf16>, vector<8x128xf32> -> vector<8x128xf32>
    %29 = vector.broadcast %3 : vector<1x128xf32> to vector<8x128xf32>
    %30 = arith.addf %28, %29 : vector<8x128xf32>
    %cst_21 = arith.constant -5.000000e+00 : f32
    %cst_22 = arith.constant 2.000000e+00 : f32
    %31 = vector.broadcast %cst_21 : f32 to vector<1x128xf32>
    %32 = arith.maximumf %31, %4 : vector<1x128xf32>
    %33 = vector.broadcast %cst_22 : f32 to vector<1x128xf32>
    %34 = arith.minimumf %33, %32 : vector<1x128xf32>
    %35 = math.exp %34 : vector<1x128xf32>
    %36 = tpu.iota {dimensions = array<i32: 1>} : vector<1x128xi32>
    %c4_i32 = arith.constant 4 : i32
    %37 = vector.broadcast %c4_i32 : i32 to vector<1x128xi32>
    %38 = arith.cmpi slt, %36, %37 : vector<1x128xi32>
    %c0_23 = arith.constant 0 : index
    %c0_24 = arith.constant 0 : index
    %39 = vector.load %arg1[%c0_23, %c0_24] : memref<8x128xbf16, #tpu.memory_space<vmem>>, vector<8x128xbf16>
    %40 = arith.extf %39 : vector<8x128xbf16> to vector<8x128xf32>
    %cst_25 = arith.constant 0.000000e+00 : f32
    %41 = vector.shape_cast %38 : vector<1x128xi1> to vector<1x128xi1>
    %42 = vector.broadcast %41 : vector<1x128xi1> to vector<8x128xi1>
    %43 = vector.broadcast %cst_25 : f32 to vector<8x128xf32>
    %44 = arith.select %42, %40, %43 : vector<8x128xi1>, vector<8x128xf32>
    %45 = vector.broadcast %35 : vector<1x128xf32> to vector<8x128xf32>
    %46 = arith.mulf %45, %44 : vector<8x128xf32>
    %47 = arith.addf %30, %46 : vector<8x128xf32>
    %c4_i32_26 = arith.constant 4 : i32
    %48 = vector.broadcast %c4_i32_26 : i32 to vector<1x128xi32>
    %49 = arith.cmpi slt, %36, %48 : vector<1x128xi32>
    %cst_27 = arith.constant 0.000000e+00 : f32
    %50 = vector.broadcast %cst_27 : f32 to vector<1x128xf32>
    %51 = arith.select %49, %34, %50 : vector<1x128xi1>, vector<1x128xf32>
    %cst_28 = arith.constant dense<0.000000e+00> : vector<1xf32>
    %52 = vector.multi_reduction <add>, %51, %cst_28 [1] : vector<1x128xf32> to vector<1xf32>
    %53 = vector.shape_cast %52 : vector<1xf32> to vector<1x1xf32>
    %cst_29 = arith.constant 0.000000e+00 : f32
    %54 = vector.broadcast %cst_29 : f32 to vector<1x1xf32>
    %55 = arith.subf %54, %53 : vector<1x1xf32>
    %cst_30 = arith.constant 3.67575407 : f32
    %56 = vector.broadcast %cst_30 : f32 to vector<1x1xf32>
    %57 = arith.subf %55, %56 : vector<1x1xf32>
    %58 = arith.mulf %44, %44 : vector<8x128xf32>
    %cst_31 = arith.constant dense<0.000000e+00> : vector<8xf32>
    %59 = vector.multi_reduction <add>, %58, %cst_31 [1] : vector<8x128xf32> to vector<8xf32>
    %60 = vector.shape_cast %59 : vector<8xf32> to vector<8x1xf32>
    %cst_32 = arith.constant -5.000000e-01 : f32
    %61 = vector.broadcast %cst_32 : f32 to vector<8x1xf32>
    %62 = arith.mulf %61, %60 : vector<8x1xf32>
    %63 = vector.broadcast %57 : vector<1x1xf32> to vector<8x1xf32>
    %64 = arith.addf %62, %63 : vector<8x1xf32>
    %c4_i32_33 = arith.constant 4 : i32
    %65 = vector.broadcast %c4_i32_33 : i32 to vector<1x128xi32>
    %66 = arith.cmpi eq, %36, %65 : vector<1x128xi32>
    %67 = vector.shape_cast %66 : vector<1x128xi1> to vector<1x128xi1>
    %68 = vector.broadcast %67 : vector<1x128xi1> to vector<8x128xi1>
    %69 = vector.shape_cast %64 : vector<8x1xf32> to vector<8x1xf32>
    %70 = vector.broadcast %69 : vector<8x1xf32> to vector<8x128xf32>
    %71 = arith.select %68, %70, %47 : vector<8x128xi1>, vector<8x128xf32>
    %c0_34 = arith.constant 0 : index
    %c0_35 = arith.constant 0 : index
    %72 = vector.load %arg7[%c0_34, %c0_35] : memref<8x128xf32, #tpu.memory_space<vmem>>, vector<8x128xf32>
    tpu.vector_store %arg7[%c0_34, %c0_35], %71 {strides = array<i32>} : memref<8x128xf32, #tpu.memory_space<vmem>>, vector<8x128xf32>,
    return
  }
  func.func @transform_0(%arg0: i32) -> (i32, i32) {
    %c0_i32 = arith.constant 0 : i32
    %c0_i32_0 = arith.constant 0 : i32
    return %arg0, %c0_i32 : i32, i32
  }
  func.func @transform_1(%arg0: i32) -> (i32, i32) {
    %c0_i32 = arith.constant 0 : i32
    %c0_i32_0 = arith.constant 0 : i32
    %c0_i32_1 = arith.constant 0 : i32
    return %c0_i32, %c0_i32_0 : i32, i32
  }
  func.func @transform_2(%arg0: i32) -> (i32, i32) {
    %c0_i32 = arith.constant 0 : i32
    %c0_i32_0 = arith.constant 0 : i32
    %c0_i32_1 = arith.constant 0 : i32
    return %c0_i32, %c0_i32_0 : i32, i32
  }
  func.func @transform_3(%arg0: i32) -> (i32, i32) {
    %c0_i32 = arith.constant 0 : i32
    %c0_i32_0 = arith.constant 0 : i32
    %c0_i32_1 = arith.constant 0 : i32
    return %c0_i32, %c0_i32_0 : i32, i32
  }
  func.func @transform_4(%arg0: i32) -> (i32, i32) {
    %c0_i32 = arith.constant 0 : i32
    %c0_i32_0 = arith.constant 0 : i32
    %c0_i32_1 = arith.constant 0 : i32
    return %c0_i32, %c0_i32_0 : i32, i32
  }
  func.func @transform_5(%arg0: i32) -> (i32, i32) {
    %c0_i32 = arith.constant 0 : i32
    %c0_i32_0 = arith.constant 0 : i32
    %c0_i32_1 = arith.constant 0 : i32
    return %c0_i32, %c0_i32_0 : i32, i32
  }
  func.func @transform_6(%arg0: i32) -> (i32, i32) {
    %c0_i32 = arith.constant 0 : i32
    %c0_i32_0 = arith.constant 0 : i32
    return %arg0, %c0_i32 : i32, i32
  }
}

</mosaic_0001>

<llo_original>
// kernel: tpu_custom_call.1
$region0: #{tpu_custom_call.1}
  #allocation0 [shape = 'u32[]', space=smem, size = 0x4, offset = 0x4, fixed_abs, tag = 'smem constant byte address 0x4 - core index']
  #allocation1 [shape = 'u32[144,128]{1,0:T(1,128)}', space=vmem, size = 0x12000, scoped, tag = 'internal scratch']
  %s0 = inlined_call_operand.hbm [shape: bf16[8,128], index: 0, kind: input, shape index: {}]
  %s1 = inlined_call_operand.hbm [shape: bf16[128,128], index: 1, kind: input, shape index: {}]
  %s2 = inlined_call_operand.hbm [shape: bf16[128,128], index: 2, kind: input, shape index: {}]
  %s3 = inlined_call_operand.hbm [shape: bf16[128,128], index: 3, kind: input, shape index: {}]
  %s4 = inlined_call_operand.hbm [shape: bf16[128,128], index: 4, kind: input, shape index: {}]
  %s5 = inlined_call_operand.vmem [shape: f32[8,128], index: 5, kind: input, shape index: {}]
  %s6 = inlined_call_operand.hbm [shape: f32[8,128], index: 6, kind: output, shape index: {}]
  %s7 = sld [smem:[#allocation0]]
  $region54: #{tpu_custom_call.1} parent=0
    _
  %s9 = ssub.s32 1, %s7
  %s10 = scalar_select 0, %s9, %s7
  $region1: #{tpu_custom_call.1} parent=0
    #allocation2 [shape = 'u8[2048]{0}', space=vmem, size = 0x800, scoped, tag = 'input window, operand 0, single buffered']
    #allocation3 [shape = 's32[1]{0}', space=sflag, size = 0x4, scoped, tag = 'scoped memory for tpu_custom_call.1']
    #allocation4 [shape = 's32[1]{0}', space=sflag, size = 0x4, scoped, tag = 'scoped memory for tpu_custom_call.1']
    #allocation5 [shape = 'u8[32768]{0}', space=vmem, size = 0x8000, scoped, tag = 'input window, operand 1, single buffered']
    #allocation6 [shape = 's32[1]{0}', space=sflag, size = 0x4, scoped, tag = 'scoped memory for tpu_custom_call.1']
    #allocation7 [shape = 'u8[32768]{0}', space=vmem, size = 0x8000, scoped, tag = 'input window, operand 2, single buffered']
    #allocation8 [shape = 'u8[32768]{0}', space=vmem, size = 0x8000, scoped, tag = 'input window, operand 3, single buffered']
    #allocation9 [shape = 's32[1]{0}', space=sflag, size = 0x4, scoped, tag = 'scoped memory for tpu_custom_call.1']
    #allocation10 [shape = 'u8[32768]{0}', space=vmem, size = 0x8000, scoped, tag = 'input window, operand 4, single buffered']
    #allocation11 [shape = 'u8[4096]{0}', space=vmem, size = 0x1000, scoped, tag = 'output window, operand 0, single buffered']
    %11 = vsyncpa [#allocation3], 0
    %12 = vsyncpa [#allocation6], 0
    %13 = vsyncpa [#allocation9], 0
    %14 = vsyncpa [#allocation4], 0
    // Predicated region
    $region2: #{tpu_custom_call.1} parent=1 // pred_check
      _
    $region3: #{tpu_custom_call.1} parent=1 // pred_check_branch
      %16 = sbr.rel (0) target = $region5
    $region4: #{tpu_custom_call.1} parent=1 // pred_region
      %s18 = ssub.s32 64, 64
      %19 = vsyncadd [#allocation3], %s18
      %s21 = sshll.u32 [#allocation2], 4
      %s22 = int_to_ptr.vmem [resolvable:$true] %s21
      %24 = dma.hbm_to_vmem [thread:$0]  %s0, 64, %s22, [#allocation3]
    $region5: #{tpu_custom_call.1} parent=1 // pred_fallthru
      _
    // Predicated region
    $region6: #{tpu_custom_call.1} parent=1 // pred_check
      _
    $region7: #{tpu_custom_call.1} parent=1 // pred_check_branch
      %26 = sbr.rel (0) target = $region9
    $region8: #{tpu_custom_call.1} parent=1 // pred_region
      %s28 = ssub.s32 1024, 1024
      %29 = vsyncadd [#allocation6], %s28
      %s30 = sshll.u32 [#allocation5], 4
      %s31 = int_to_ptr.vmem [resolvable:$true] %s30
      %36 = dma.hbm_to_vmem [thread:$0]  %s1, 1024, %s31, [#allocation6], 64, 64, 4
    $region9: #{tpu_custom_call.1} parent=1 // pred_fallthru
      _
    // Predicated region
    $region10: #{tpu_custom_call.1} parent=1 // pred_check
      _
    $region11: #{tpu_custom_call.1} parent=1 // pred_check_branch
      %38 = sbr.rel (0) target = $region13
    $region12: #{tpu_custom_call.1} parent=1 // pred_region
      %s40 = ssub.s32 1024, 1024
      %41 = vsyncadd [#allocation6], %s40
      %s42 = sshll.u32 [#allocation7], 4
      %s43 = int_to_ptr.vmem [resolvable:$true] %s42
      %48 = dma.hbm_to_vmem [thread:$0]  %s2, 1024, %s43, [#allocation6], 64, 64, 4
    $region13: #{tpu_custom_call.1} parent=1 // pred_fallthru
      _
    // Predicated region
    $region14: #{tpu_custom_call.1} parent=1 // pred_check
      _
    $region15: #{tpu_custom_call.1} parent=1 // pred_check_branch
      %50 = sbr.rel (0) target = $region17
    $region16: #{tpu_custom_call.1} parent=1 // pred_region
      %s52 = ssub.s32 1024, 1024
      %53 = vsyncadd [#allocation9], %s52
      %s54 = sshll.u32 [#allocation8], 4
      %s55 = int_to_ptr.vmem [resolvable:$true] %s54
      %60 = dma.hbm_to_vmem [thread:$0]  %s3, 1024, %s55, [#allocation9], 64, 64, 4
    $region17: #{tpu_custom_call.1} parent=1 // pred_fallthru
      _
    // Predicated region
    $region18: #{tpu_custom_call.1} parent=1 // pred_check
      _
    $region19: #{tpu_custom_call.1} parent=1 // pred_check_branch
      %62 = sbr.rel (0) target = $region21
    $region20: #{tpu_custom_call.1} parent=1 // pred_region
      %s64 = ssub.s32 1024, 1024
      %65 = vsyncadd [#allocation9], %s64
      %s66 = sshll.u32 [#allocation10], 4
      %s67 = int_to_ptr.vmem [resolvable:$true] %s66
      %72 = dma.hbm_to_vmem [thread:$0]  %s4, 1024, %s67, [#allocation9], 64, 64, 4
    $region21: #{tpu_custom_call.1} parent=1 // pred_fallthru
      _
    // Predicated region
    $region22: #{tpu_custom_call.1} parent=1 // pred_check
      _
    $region23: #{tpu_custom_call.1} parent=1 // pred_check_branch
      %74 = sbr.rel (0) target = $region25
    $region24: #{tpu_custom_call.1} parent=1 // pred_region
      _
    $region25: #{tpu_custom_call.1} parent=1 // pred_fallthru
      _
    // Predicated region
    $region26: #{tpu_custom_call.1} parent=1 // pred_check
      _
    $region27: #{tpu_custom_call.1} parent=1 // pred_check_branch
      %76 = sbr.rel (0) target = $region29
    $region28: #{tpu_custom_call.1} parent=1 // pred_region
      %77 = dma.done [#allocation3], 64
    $region29: #{tpu_custom_call.1} parent=1 // pred_fallthru
      _
    // Predicated region
    $region30: #{tpu_custom_call.1} parent=1 // pred_check
      _
    $region31: #{tpu_custom_call.1} parent=1 // pred_check_branch
      %79 = sbr.rel (0) target = $region33
    $region32: #{tpu_custom_call.1} parent=1 // pred_region
      %80 = dma.done [#allocation6], 1024
    $region33: #{tpu_custom_call.1} parent=1 // pred_fallthru
      _
    // Predicated region
    $region34: #{tpu_custom_call.1} parent=1 // pred_check
      _
    $region35: #{tpu_custom_call.1} parent=1 // pred_check_branch
      %82 = sbr.rel (0) target = $region37
    $region36: #{tpu_custom_call.1} parent=1 // pred_region
      %83 = dma.done [#allocation6], 1024
    $region37: #{tpu_custom_call.1} parent=1 // pred_fallthru
      _
    // Predicated region
    $region38: #{tpu_custom_call.1} parent=1 // pred_check
      _
    $region39: #{tpu_custom_call.1} parent=1 // pred_check_branch
      %85 = sbr.rel (0) target = $region41
    $region40: #{tpu_custom_call.1} parent=1 // pred_region
      %86 = dma.done [#allocation9], 1024
    $region41: #{tpu_custom_call.1} parent=1 // pred_fallthru
      _
    // Predicated region
    $region42: #{tpu_custom_call.1} parent=1 // pred_check
      _
    $region43: #{tpu_custom_call.1} parent=1 // pred_check_branch
      %88 = sbr.rel (0) target = $region45
    $region44: #{tpu_custom_call.1} parent=1 // pred_region
      %89 = dma.done [#allocation9], 1024
    $region45: #{tpu_custom_call.1} parent=1 // pred_fallthru
      _
    %v91 = vld [vmem:[%s5] sm:$0x1]
    %v92 = vld [vmem:[%s5 + $0x1] sm:$0x1]
    %v93 = vld [vmem:[%s5 + $0x2] sm:$0x1]
    %v94 = vld [vmem:[%s5 + $0x3] sm:$0x1]
    %v95 = vld [vmem:[%s5 + $0x4] sm:$0x1]
    %v96 = vld [vmem:[#allocation2] sm:$0xf]
    %v97 = vld [vmem:[#allocation5] sm:$0xf]
    %v98 = vld [vmem:[#allocation5 + $0x4] sm:$0xf]
    %v99 = vld [vmem:[#allocation5 + $0x8] sm:$0xf]
    %v100 = vld [vmem:[#allocation5 + $0xc] sm:$0xf]
    %v101 = vld [vmem:[#allocation5 + $0x10] sm:$0xf]
    %v102 = vld [vmem:[#allocation5 + $0x14] sm:$0xf]
    %v103 = vld [vmem:[#allocation5 + $0x18] sm:$0xf]
    %v104 = vld [vmem:[#allocation5 + $0x1c] sm:$0xf]
    %v105 = vld [vmem:[#allocation5 + $0x20] sm:$0xf]
    %v106 = vld [vmem:[#allocation5 + $0x24] sm:$0xf]
    %v107 = vld [vmem:[#allocation5 + $0x28] sm:$0xf]
    %v108 = vld [vmem:[#allocation5 + $0x2c] sm:$0xf]
    %v109 = vld [vmem:[#allocation5 + $0x30] sm:$0xf]
    %v110 = vld [vmem:[#allocation5 + $0x34] sm:$0xf]
    %v111 = vld [vmem:[#allocation5 + $0x38] sm:$0xf]
    %v112 = vld [vmem:[#allocation5 + $0x3c] sm:$0xf]
    %v113 = vlaneseq
    %v114 = vshrl.u32 %v113, 7
    %v115 = vsub.s32 0, %v114
    %v116 = vrot.slane %v91, %v115
    %v133 = vunpack.c.l.b16 %v97
    %v134 = vunpack.c.l.b16 %v98
    %v135 = vunpack.c.l.b16 %v99
    %v136 = vunpack.c.l.b16 %v100
    %v137 = vunpack.c.l.b16 %v101
    %v138 = vunpack.c.l.b16 %v102
    %v139 = vunpack.c.l.b16 %v103
    %v140 = vunpack.c.l.b16 %v104
    %v141 = vunpack.c.l.b16 %v105
    %v142 = vunpack.c.l.b16 %v106
    %v143 = vunpack.c.l.b16 %v107
    %v144 = vunpack.c.l.b16 %v108
    %v145 = vunpack.c.l.b16 %v109
    %v146 = vunpack.c.l.b16 %v110
    %v147 = vunpack.c.l.b16 %v111
    %v148 = vunpack.c.l.b16 %v112
    %v149 = vpack.c.b16 %v134, %v133
    %v150 = vpack.c.b16 %v136, %v135
    %v151 = vpack.c.b16 %v138, %v137
    %v152 = vpack.c.b16 %v140, %v139
    %v153 = vpack.c.b16 %v142, %v141
    %v154 = vpack.c.b16 %v144, %v143
    %v155 = vpack.c.b16 %v146, %v145
    %v156 = vpack.c.b16 %v148, %v147
    %165 = vmatprep.subr.bf16.mxu0 0
    %166 = vmatpush1.bf16.msra.mxu0 %v149
    %167 = vmatprep.subr.bf16.mxu0 0
    %168 = vmatpush1.bf16.msra.mxu0 %v150
    %169 = vmatprep.subr.bf16.mxu0 0
    %170 = vmatpush1.bf16.msra.mxu0 %v151
    %171 = vmatprep.subr.bf16.mxu0 0
    %172 = vmatpush1.bf16.msra.mxu0 %v152
    %173 = vmatprep.subr.bf16.mxu0 0
    %174 = vmatpush1.bf16.msra.mxu0 %v153
    %175 = vmatprep.subr.bf16.mxu0 0
    %176 = vmatpush1.bf16.msra.mxu0 %v154
    %177 = vmatprep.subr.bf16.mxu0 0
    %178 = vmatpush1.bf16.msra.mxu0 %v155
    %179 = vmatprep.subr.bf16.mxu0 0
    %180 = vmatpush1.bf16.msra.mxu0 %v156
    %181 = vmatprep.subr.bf16.mxu0 0
    %182 = vmatpush1.bf16.msra.mxu0 0
    %183 = vmatprep.subr.bf16.mxu0 0
    %184 = vmatpush1.bf16.msra.mxu0 0
    %185 = vmatprep.subr.bf16.mxu0 0
    %186 = vmatpush1.bf16.msra.mxu0 0
    %187 = vmatprep.subr.bf16.mxu0 0
    %188 = vmatpush1.bf16.msra.mxu0 0
    %189 = vmatprep.subr.bf16.mxu0 0
    %190 = vmatpush1.bf16.msra.mxu0 0
    %191 = vmatprep.subr.bf16.mxu0 0
    %192 = vmatpush1.bf16.msra.mxu0 0
    %193 = vmatprep.subr.bf16.mxu0 0
    %194 = vmatpush1.bf16.msra.mxu0 0
    %195 = vmatprep.subr.bf16.mxu0 0
    %196 = vmatpush1.bf16.msra.mxu0 0
    %197 = vmatprep.mubr.bf16.mxu0 0
    %198 = vmatmul.mubr.bf16.gmra.mrb[0].mxu0 %v96
    %v199 = vpop.f32.mrb[0].mxu0
    %v200 = vadd.f32 %v116, %v199
    %v201 = vpop.f32.mrb[0].mxu0
    %v202 = vpop.f32.mrb[0].mxu0
    %v203 = vpop.f32.mrb[0].mxu0
    %204 = vdwg.mxu0
    %v205 = vmax.f32 %v200, 0.0
    %v206 = vpack.c.bf16 %v205, %v205
    %v207 = vld [vmem:[#allocation7] sm:$0xf]
    %v208 = vld [vmem:[#allocation7 + $0x4] sm:$0xf]
    %v209 = vld [vmem:[#allocation7 + $0x8] sm:$0xf]
    %v210 = vld [vmem:[#allocation7 + $0xc] sm:$0xf]
    %v211 = vld [vmem:[#allocation7 + $0x10] sm:$0xf]
    %v212 = vld [vmem:[#allocation7 + $0x14] sm:$0xf]
    %v213 = vld [vmem:[#allocation7 + $0x18] sm:$0xf]
    %v214 = vld [vmem:[#allocation7 + $0x1c] sm:$0xf]
    %v215 = vld [vmem:[#allocation7 + $0x20] sm:$0xf]
    %v216 = vld [vmem:[#allocation7 + $0x24] sm:$0xf]
    %v217 = vld [vmem:[#allocation7 + $0x28] sm:$0xf]
    %v218 = vld [vmem:[#allocation7 + $0x2c] sm:$0xf]
    %v219 = vld [vmem:[#allocation7 + $0x30] sm:$0xf]
    %v220 = vld [vmem:[#allocation7 + $0x34] sm:$0xf]
    %v221 = vld [vmem:[#allocation7 + $0x38] sm:$0xf]
    %v222 = vld [vmem:[#allocation7 + $0x3c] sm:$0xf]
    %v223 = vlaneseq
    %v224 = vshrl.u32 %v223, 7
    %v225 = vsub.s32 0, %v224
    %v226 = vrot.slane %v92, %v225
    %v243 = vunpack.c.l.b16 %v207
    %v244 = vunpack.c.l.b16 %v208
    %v245 = vunpack.c.l.b16 %v209
    %v246 = vunpack.c.l.b16 %v210
    %v247 = vunpack.c.l.b16 %v211
    %v248 = vunpack.c.l.b16 %v212
    %v249 = vunpack.c.l.b16 %v213
    %v250 = vunpack.c.l.b16 %v214
    %v251 = vunpack.c.l.b16 %v215
    %v252 = vunpack.c.l.b16 %v216
    %v253 = vunpack.c.l.b16 %v217
    %v254 = vunpack.c.l.b16 %v218
    %v255 = vunpack.c.l.b16 %v219
    %v256 = vunpack.c.l.b16 %v220
    %v257 = vunpack.c.l.b16 %v221
    %v258 = vunpack.c.l.b16 %v222
    %v259 = vpack.c.b16 %v244, %v243
    %v260 = vpack.c.b16 %v246, %v245
    %v261 = vpack.c.b16 %v248, %v247
    %v262 = vpack.c.b16 %v250, %v249
    %v263 = vpack.c.b16 %v252, %v251
    %v264 = vpack.c.b16 %v254, %v253
    %v265 = vpack.c.b16 %v256, %v255
    %v266 = vpack.c.b16 %v258, %v257
    %275 = vmatprep.subr.bf16.mxu0 0
    %276 = vmatpush1.bf16.msra.mxu0 %v259
    %277 = vmatprep.subr.bf16.mxu0 0
    %278 = vmatpush1.bf16.msra.mxu0 %v260
    %279 = vmatprep.subr.bf16.mxu0 0
    %280 = vmatpush1.bf16.msra.mxu0 %v261
    %281 = vmatprep.subr.bf16.mxu0 0
    %282 = vmatpush1.bf16.msra.mxu0 %v262
    %283 = vmatprep.subr.bf16.mxu0 0
    %284 = vmatpush1.bf16.msra.mxu0 %v263
    %285 = vmatprep.subr.bf16.mxu0 0
    %286 = vmatpush1.bf16.msra.mxu0 %v264
    %287 = vmatprep.subr.bf16.mxu0 0
    %288 = vmatpush1.bf16.msra.mxu0 %v265
    %289 = vmatprep.subr.bf16.mxu0 0
    %290 = vmatpush1.bf16.msra.mxu0 %v266
    %291 = vmatprep.subr.bf16.mxu0 0
    %292 = vmatpush1.bf16.msra.mxu0 0
    %293 = vmatprep.subr.bf16.mxu0 0
    %294 = vmatpush1.bf16.msra.mxu0 0
    %295 = vmatprep.subr.bf16.mxu0 0
    %296 = vmatpush1.bf16.msra.mxu0 0
    %297 = vmatprep.subr.bf16.mxu0 0
    %298 = vmatpush1.bf16.msra.mxu0 0
    %299 = vmatprep.subr.bf16.mxu0 0
    %300 = vmatpush1.bf16.msra.mxu0 0
    %301 = vmatprep.subr.bf16.mxu0 0
    %302 = vmatpush1.bf16.msra.mxu0 0
    %303 = vmatprep.subr.bf16.mxu0 0
    %304 = vmatpush1.bf16.msra.mxu0 0
    %305 = vmatprep.subr.bf16.mxu0 0
    %306 = vmatpush1.bf16.msra.mxu0 0
    %307 = vmatprep.mubr.bf16.mxu0 0
    %308 = vmatmul.mubr.bf16.gmra.mrb[0].mxu0 %v206
    %v309 = vpop.f32.mrb[0].mxu0
    %v310 = vadd.f32 %v226, %v309
    %v311 = vpop.f32.mrb[0].mxu0
    %v312 = vpop.f32.mrb[0].mxu0
    %v313 = vpop.f32.mrb[0].mxu0
    %314 = vdwg.mxu0
    %v315 = vmax.f32 %v310, 0.0
    %v316 = vpack.c.bf16 %v315, %v315
    %v317 = vld [vmem:[#allocation8] sm:$0xf]
    %v318 = vld [vmem:[#allocation8 + $0x4] sm:$0xf]
    %v319 = vld [vmem:[#allocation8 + $0x8] sm:$0xf]
    %v320 = vld [vmem:[#allocation8 + $0xc] sm:$0xf]
    %v321 = vld [vmem:[#allocation8 + $0x10] sm:$0xf]
    %v322 = vld [vmem:[#allocation8 + $0x14] sm:$0xf]
    %v323 = vld [vmem:[#allocation8 + $0x18] sm:$0xf]
    %v324 = vld [vmem:[#allocation8 + $0x1c] sm:$0xf]
    %v325 = vld [vmem:[#allocation8 + $0x20] sm:$0xf]
    %v326 = vld [vmem:[#allocation8 + $0x24] sm:$0xf]
    %v327 = vld [vmem:[#allocation8 + $0x28] sm:$0xf]
    %v328 = vld [vmem:[#allocation8 + $0x2c] sm:$0xf]
    %v329 = vld [vmem:[#allocation8 + $0x30] sm:$0xf]
    %v330 = vld [vmem:[#allocation8 + $0x34] sm:$0xf]
    %v331 = vld [vmem:[#allocation8 + $0x38] sm:$0xf]
    %v332 = vld [vmem:[#allocation8 + $0x3c] sm:$0xf]
    %v333 = vlaneseq
    %v334 = vshrl.u32 %v333, 7
    %v335 = vsub.s32 0, %v334
    %v336 = vrot.slane %v93, %v335
    %v353 = vunpack.c.l.b16 %v317
    %v354 = vunpack.c.l.b16 %v318
    %v355 = vunpack.c.l.b16 %v319
    %v356 = vunpack.c.l.b16 %v320
    %v357 = vunpack.c.l.b16 %v321
    %v358 = vunpack.c.l.b16 %v322
    %v359 = vunpack.c.l.b16 %v323
    %v360 = vunpack.c.l.b16 %v324
    %v361 = vunpack.c.l.b16 %v325
    %v362 = vunpack.c.l.b16 %v326
    %v363 = vunpack.c.l.b16 %v327
    %v364 = vunpack.c.l.b16 %v328
    %v365 = vunpack.c.l.b16 %v329
    %v366 = vunpack.c.l.b16 %v330
    %v367 = vunpack.c.l.b16 %v331
    %v368 = vunpack.c.l.b16 %v332
    %v369 = vpack.c.b16 %v354, %v353
    %v370 = vpack.c.b16 %v356, %v355
    %v371 = vpack.c.b16 %v358, %v357
    %v372 = vpack.c.b16 %v360, %v359
    %v373 = vpack.c.b16 %v362, %v361
    %v374 = vpack.c.b16 %v364, %v363
    %v375 = vpack.c.b16 %v366, %v365
    %v376 = vpack.c.b16 %v368, %v367
    %385 = vmatprep.subr.bf16.mxu0 0
    %386 = vmatpush1.bf16.msra.mxu0 %v369
    %387 = vmatprep.subr.bf16.mxu0 0
    %388 = vmatpush1.bf16.msra.mxu0 %v370
    %389 = vmatprep.subr.bf16.mxu0 0
    %390 = vmatpush1.bf16.msra.mxu0 %v371
    %391 = vmatprep.subr.bf16.mxu0 0
    %392 = vmatpush1.bf16.msra.mxu0 %v372
    %393 = vmatprep.subr.bf16.mxu0 0
    %394 = vmatpush1.bf16.msra.mxu0 %v373
    %395 = vmatprep.subr.bf16.mxu0 0
    %396 = vmatpush1.bf16.msra.mxu0 %v374
    %397 = vmatprep.subr.bf16.mxu0 0
    %398 = vmatpush1.bf16.msra.mxu0 %v375
    %399 = vmatprep.subr.bf16.mxu0 0
    %400 = vmatpush1.bf16.msra.mxu0 %v376
    %401 = vmatprep.subr.bf16.mxu0 0
    %402 = vmatpush1.bf16.msra.mxu0 0
    %403 = vmatprep.subr.bf16.mxu0 0
    %404 = vmatpush1.bf16.msra.mxu0 0
    %405 = vmatprep.subr.bf16.mxu0 0
    %406 = vmatpush1.bf16.msra.mxu0 0
    %407 = vmatprep.subr.bf16.mxu0 0
    %408 = vmatpush1.bf16.msra.mxu0 0
    %409 = vmatprep.subr.bf16.mxu0 0
    %410 = vmatpush1.bf16.msra.mxu0 0
    %411 = vmatprep.subr.bf16.mxu0 0
    %412 = vmatpush1.bf16.msra.mxu0 0
    %413 = vmatprep.subr.bf16.mxu0 0
    %414 = vmatpush1.bf16.msra.mxu0 0
    %415 = vmatprep.subr.bf16.mxu0 0
    %416 = vmatpush1.bf16.msra.mxu0 0
    %417 = vmatprep.mubr.bf16.mxu0 0
    %418 = vmatmul.mubr.bf16.gmra.mrb[0].mxu0 %v316
    %v419 = vpop.f32.mrb[0].mxu0
    %v420 = vadd.f32 %v336, %v419
    %v421 = vpop.f32.mrb[0].mxu0
    %v422 = vpop.f32.mrb[0].mxu0
    %v423 = vpop.f32.mrb[0].mxu0
    %424 = vdwg.mxu0
    %v425 = vmax.f32 %v420, 0.0
    %v426 = vpack.c.bf16 %v425, %v425
    %v427 = vld [vmem:[#allocation10] sm:$0xf]
    %v428 = vld [vmem:[#allocation10 + $0x4] sm:$0xf]
    %v429 = vld [vmem:[#allocation10 + $0x8] sm:$0xf]
    %v430 = vld [vmem:[#allocation10 + $0xc] sm:$0xf]
    %v431 = vld [vmem:[#allocation10 + $0x10] sm:$0xf]
    %v432 = vld [vmem:[#allocation10 + $0x14] sm:$0xf]
    %v433 = vld [vmem:[#allocation10 + $0x18] sm:$0xf]
    %v434 = vld [vmem:[#allocation10 + $0x1c] sm:$0xf]
    %v435 = vld [vmem:[#allocation10 + $0x20] sm:$0xf]
    %v436 = vld [vmem:[#allocation10 + $0x24] sm:$0xf]
    %v437 = vld [vmem:[#allocation10 + $0x28] sm:$0xf]
    %v438 = vld [vmem:[#allocation10 + $0x2c] sm:$0xf]
    %v439 = vld [vmem:[#allocation10 + $0x30] sm:$0xf]
    %v440 = vld [vmem:[#allocation10 + $0x34] sm:$0xf]
    %v441 = vld [vmem:[#allocation10 + $0x38] sm:$0xf]
    %v442 = vld [vmem:[#allocation10 + $0x3c] sm:$0xf]
    %v443 = vlaneseq
    %v444 = vshrl.u32 %v443, 7
    %v445 = vsub.s32 0, %v444
    %v446 = vrot.slane %v94, %v445
    %v463 = vunpack.c.l.b16 %v427
    %v464 = vunpack.c.l.b16 %v428
    %v465 = vunpack.c.l.b16 %v429
    %v466 = vunpack.c.l.b16 %v430
    %v467 = vunpack.c.l.b16 %v431
    %v468 = vunpack.c.l.b16 %v432
    %v469 = vunpack.c.l.b16 %v433
    %v470 = vunpack.c.l.b16 %v434
    %v471 = vunpack.c.l.b16 %v435
    %v472 = vunpack.c.l.b16 %v436
    %v473 = vunpack.c.l.b16 %v437
    %v474 = vunpack.c.l.b16 %v438
    %v475 = vunpack.c.l.b16 %v439
    %v476 = vunpack.c.l.b16 %v440
    %v477 = vunpack.c.l.b16 %v441
    %v478 = vunpack.c.l.b16 %v442
    %v479 = vpack.c.b16 %v464, %v463
    %v480 = vpack.c.b16 %v466, %v465
    %v481 = vpack.c.b16 %v468, %v467
    %v482 = vpack.c.b16 %v470, %v469
    %v483 = vpack.c.b16 %v472, %v471
    %v484 = vpack.c.b16 %v474, %v473
    %v485 = vpack.c.b16 %v476, %v475
    %v486 = vpack.c.b16 %v478, %v477
    %495 = vmatprep.subr.bf16.mxu0 0
    %496 = vmatpush1.bf16.msra.mxu0 %v479
    %497 = vmatprep.subr.bf16.mxu0 0
    %498 = vmatpush1.bf16.msra.mxu0 %v480
    %499 = vmatprep.subr.bf16.mxu0 0
    %500 = vmatpush1.bf16.msra.mxu0 %v481
    %501 = vmatprep.subr.bf16.mxu0 0
    %502 = vmatpush1.bf16.msra.mxu0 %v482
    %503 = vmatprep.subr.bf16.mxu0 0
    %504 = vmatpush1.bf16.msra.mxu0 %v483
    %505 = vmatprep.subr.bf16.mxu0 0
    %506 = vmatpush1.bf16.msra.mxu0 %v484
    %507 = vmatprep.subr.bf16.mxu0 0
    %508 = vmatpush1.bf16.msra.mxu0 %v485
    %509 = vmatprep.subr.bf16.mxu0 0
    %510 = vmatpush1.bf16.msra.mxu0 %v486
    %511 = vmatprep.subr.bf16.mxu0 0
    %512 = vmatpush1.bf16.msra.mxu0 0
    %513 = vmatprep.subr.bf16.mxu0 0
    %514 = vmatpush1.bf16.msra.mxu0 0
    %515 = vmatprep.subr.bf16.mxu0 0
    %516 = vmatpush1.bf16.msra.mxu0 0
    %517 = vmatprep.subr.bf16.mxu0 0
    %518 = vmatpush1.bf16.msra.mxu0 0
    %519 = vmatprep.subr.bf16.mxu0 0
    %520 = vmatpush1.bf16.msra.mxu0 0
    %521 = vmatprep.subr.bf16.mxu0 0
    %522 = vmatpush1.bf16.msra.mxu0 0
    %523 = vmatprep.subr.bf16.mxu0 0
    %524 = vmatpush1.bf16.msra.mxu0 0
    %525 = vmatprep.subr.bf16.mxu0 0
    %526 = vmatpush1.bf16.msra.mxu0 0
    %527 = vmatprep.mubr.bf16.mxu0 0
    %528 = vmatmul.mubr.bf16.gmra.mrb[0].mxu0 %v426
    %v529 = vpop.f32.mrb[0].mxu0
    %v530 = vadd.f32 %v446, %v529
    %v531 = vpop.f32.mrb[0].mxu0
    %v532 = vpop.f32.mrb[0].mxu0
    %v533 = vpop.f32.mrb[0].mxu0
    %534 = vdwg.mxu0
    %v535 = vmax.f32 %v95, -5.0
    %v536 = vmin.f32 %v535, 2.0
    %v537 = vmul.f32 %v536, 1.442695
    %v538 = vpow.pop %v537
    %v539 = vlaneseq
    %v540 = vand.u32 %v539, 127
    %vm541 = vcmp.lt.s32.totalorder %v540, 4
    %v542 = vunpack.c.l.bf16 %v96
    %v543 = vsel %vm541, 1, 0
    %vm544 = vcmp.eq.s32.totalorder %v543, 1
    %v545 = vsel %vm544, %v542, 0.0
    %v546 = vlaneseq
    %v547 = vshrl.u32 %v546, 7
    %v548 = vsub.s32 0, %v547
    %v549 = vrot.slane %v538, %v548
    %v550 = vmul.f32 %v549, %v545
    %v551 = vadd.f32 %v530, %v550
    %v552 = vsel %vm541, %v536, 0.0
    %vm553 = vcmask 1040384
    %v554 = vsel %vm553, %v552, 0.0
    %555 = vadd.xlane.f32.xlu0 %v554
    %v556 = vpop.xlane.xlu0 %555
    %v557 = vsub.f32 0.0, %v556
    %v558 = vsub.f32 %v557, 3.675754
    %v559 = vmul.f32 %v545, %v545
    %560 = vadd.xlane.f32.xlu0 %v559
    %v561 = vpop.xlane.xlu0 %560
    %v562 = vmul.f32 %v561, -0.5
    %v563 = vlaneseq
    %v564 = vshrl.u32 %v563, 7
    %v565 = vsub.s32 0, %v564
    %v566 = vrot.slane %v558, %v565
    %v567 = vadd.f32 %v562, %v566
    %vm568 = vcmp.eq.s32.totalorder %v540, 4
    %v569 = vsel %vm568, 1, 0
    %vm570 = vcmp.eq.s32.totalorder %v569, 1
    %v571 = vsel %vm570, %v567, %v551
    %572 = vst [vmem:[#allocation11] sm:$0xff] %v571
    // Predicated region
    $region46: #{tpu_custom_call.1} parent=1 // pred_check
      _
    $region47: #{tpu_custom_call.1} parent=1 // pred_check_branch
      %574 = sbr.rel (0) target = $region49
    $region48: #{tpu_custom_call.1} parent=1 // pred_region
      %s576 = ssub.s32 128, 128
      %577 = vsyncadd [#allocation4], %s576
      %s579 = sshll.u32 [#allocation11], 4
      %s580 = int_to_ptr.vmem [resolvable:$true] %s579
      %582 = dma.vmem_to_hbm [thread:$0]  %s580, 128, %s6, [#allocation4]
    $region49: #{tpu_custom_call.1} parent=1 // pred_fallthru
      _
    // Predicated region
    $region50: #{tpu_custom_call.1} parent=1 // pred_check
      _
    $region51: #{tpu_custom_call.1} parent=1 // pred_check_branch
      %584 = sbr.rel (0) target = $region53
    $region52: #{tpu_custom_call.1} parent=1 // pred_region
      %585 = dma.done [#allocation4], 128
    $region53: #{tpu_custom_call.1} parent=1 // pred_fallthru
      _
    %586 = vsyncpa [#allocation3], 1
    %587 = vsyncpa [#allocation6], 1
    %588 = vsyncpa [#allocation9], 1
    %589 = vsyncpa [#allocation4], 1

</llo_original>
